<compile_context>
chip_gen: v6e
topology: v6e:2x2x1
jax: 0.10.0
libtpu: 0.0.40
codegen_flags: <defaults>
</compile_context>

<pallas_src>
import jax
import jax.numpy as jnp
from jax import lax
from jax.experimental import pallas as pl
from jax.experimental.pallas import tpu as pltpu


def _upconv_kernel(x_ref, w_ref, shift_ref, o_ref):
    # x_ref:     (TH+2, W+2, Cin)   zero-padded, halo'd low-res row tile
    # w_ref:     (9*Cin, 4*Cout)    phase-packed weights, BN scale folded in
    # shift_ref: (1, 4*Cout)        folded BN shift, tiled over the 4 phases
    # o_ref:     (TH, 2, W, 2*Cout) output row tile; dims = (r, py, c, (px, co))
    TH = o_ref.shape[0]
    W = x_ref.shape[1] - 2
    Cin = x_ref.shape[2]
    C2 = o_ref.shape[3]            # 2*Cout  (px x co)

    x = x_ref[...]                 # single load of the tile

    # In-register im2col over the 3x3 low-res window; feature order (d, dc, ci)
    # matches the row order of w_ref.  All slices are static; the reshape is a
    # pure relabel (W is a multiple of 8, last dim unchanged).
    taps = []
    for d in range(3):
        for dc in range(3):
            taps.append(x[d:d + TH, dc:dc + W, :].reshape(TH * W, Cin))
    patch = jnp.concatenate(taps, axis=-1)                       # (TH*W, 9*Cin)

    # One MXU contraction for all 4 output phases, f32 accumulation.
    y = jnp.dot(patch, w_ref[...], preferred_element_type=jnp.float32)
    # Fused BatchNorm shift (scale already folded into the weights) + ReLU.
    y = jnp.maximum(y + shift_ref[...], 0.0)

    # Columns are (py, px, co); rows are (r, c).  Split py into the two output
    # sub-rows using lane slices only (no sublane<->lane relayout needed).
    y = y.reshape(TH, W, 2 * C2)                                 # relabel only
    o_ref[:, 0, :, :] = y[:, :, :C2].astype(o_ref.dtype)         # out rows 2r+0
    o_ref[:, 1, :, :] = y[:, :, C2:].astype(o_ref.dtype)         # out rows 2r+1


def _pick_row_tile(H, W, Cout, N, out_bytes_cap=2 << 20, target_steps=8):
    """Largest row tile whose output block fits the byte cap, shrunk until the
    grid has enough steps to feed both v7x TensorCores / the DMA pipeline."""
    best = H
    for th in sorted((d for d in range(1, H + 1) if H % d == 0), reverse=True):
        if 2 * th * 2 * W * Cout * 4 > out_bytes_cap:
            continue
        best = th
        if N * (H // th) >= target_steps:
            break
    return best


def up_conv_forward(x_nchw, weight_oihw, gamma, beta, running_mean, running_var,
                    eps=1e-5, compute_dtype=jnp.float32):
    """up_conv forward: (N, Cin, H, W) -> (N, Cout, 2H, 2W). Inference BN."""
    N, Cin, H, W = map(int, x_nchw.shape)
    Cout = int(weight_oihw.shape[0])
    Hu, Wu = 2 * H, 2 * W
    assert W % 8 == 0, "width must be sublane-friendly for the relabel reshapes"

    TH = _pick_row_tile(H, W, Cout, N)
    T = H // TH

    # --- low-res glue: NCHW -> NHWC, 1-px zero pad, halo'd row tiles -----------
    x_nhwc = jnp.transpose(x_nchw, (0, 2, 3, 1))                  # (N,H,W,Cin)
    x_pad = jnp.pad(x_nhwc, ((0, 0), (1, 1), (1, 1), (0, 0)))     # (N,H+2,W+2,Cin)
    x_tiles = jnp.stack([x_pad[:, t * TH:t * TH + TH + 2] for t in range(T)],
                        axis=1).astype(compute_dtype)             # (N,T,TH+2,W+2,Cin)
    # NOTE: with Cin on the last axis the block is lane-dense for production
    # Cin >= 128; the lane padding at the demo Cin=4 is accepted (tiny tiles).

    # --- fold {upsample, conv} into phase weights -------------------------------
    # Output (2r+py, 2c+px) is a 3x3 low-res contraction whose taps are pre-summed
    # per phase:  py=0: d0<-ky0, d1<-ky1+ky2 ; py=1: d1<-ky0+ky1, d2<-ky2 (same in x).
    w3 = jnp.transpose(weight_oihw, (2, 3, 1, 0)).astype(jnp.float32)  # (ky,kx,ci,co)
    R3 = jnp.array([[[1., 0., 0.], [0., 1., 1.], [0., 0., 0.]],
                    [[0., 0., 0.], [1., 1., 0.], [0., 0., 1.]]], jnp.float32)
    wbig = jnp.einsum('pdy,qex,yxio->pqdeio', R3, R3, w3)    # (py,px,d,dc,ci,co)
    # matmul operand: rows (d, dc, ci), columns (py, px, co)
    wmat = jnp.transpose(wbig, (2, 3, 4, 0, 1, 5)).reshape(9 * Cin, 4 * Cout)

    # --- fold BN (inference) scale into the weights; only the shift remains -----
    scale = gamma / jnp.sqrt(running_var + eps)
    shift = beta - running_mean * scale
    wmat = (wmat * jnp.tile(scale, 4)[None, :]).astype(compute_dtype)
    shift4 = jnp.tile(shift, 4).reshape(1, 4 * Cout).astype(jnp.float32)

    # --- generation-aware VMEM budget (v7x: 64 MiB physical -> ~48 MiB) ---------
    try:
        vmem_cap = int(pltpu.get_tpu_info().vmem_capacity_bytes)
    except Exception:
        vmem_cap = 128 * 1024 * 1024
    vmem_limit = int(min(vmem_cap * 3 // 4, 96 * 1024 * 1024))

    out5 = pl.pallas_call(
        _upconv_kernel,
        out_shape=jax.ShapeDtypeStruct((N, H, 2, W, 2 * Cout), x_nchw.dtype),
        grid_spec=pltpu.PrefetchScalarGridSpec(
            num_scalar_prefetch=0,
            grid=(N, T),
            in_specs=[
                # one halo'd row tile per step (no full-image VMEM residence)
                pl.BlockSpec((None, None, TH + 2, W + 2, Cin),
                             lambda n, t: (n, t, 0, 0, 0)),
                # grid-invariant operands: single-buffered
                pl.BlockSpec((9 * Cin, 4 * Cout), lambda n, t: (0, 0),
                             pipeline_mode=pl.Buffered(1)),
                pl.BlockSpec((1, 4 * Cout), lambda n, t: (0, 0),
                             pipeline_mode=pl.Buffered(1)),
            ],
            out_specs=pl.BlockSpec((None, TH, 2, W, 2 * Cout),
                                   lambda n, t: (n, t, 0, 0, 0)),
        ),
        compiler_params=pltpu.CompilerParams(
            dimension_semantics=("parallel", "parallel"),
            vmem_limit_bytes=vmem_limit),
        cost_estimate=pl.CostEstimate(
            flops=2 * N * H * W * 9 * Cin * 4 * Cout,
            transcendentals=0,
            bytes_accessed=int(x_tiles.size * x_tiles.dtype.itemsize
                               + wmat.size * wmat.dtype.itemsize
                               + 4 * N * Hu * Wu * Cout)),
    )(x_tiles, wmat, shift4)

    # (N, H, 2, W, 2*Cout) is row-major-identical to NHWC (N, Hu, Wu, Cout);
    # the reshape is free.  Final transpose back to NCHW to match PyTorch.
    out_nhwc = out5.reshape(N, Hu, Wu, Cout)
    return jnp.transpose(out_nhwc, (0, 3, 1, 2))


def _reference(x_nchw, weight_oihw, gamma, beta, mean, var, eps=1e-5):
    x_up = jnp.repeat(jnp.repeat(x_nchw, 2, axis=2), 2, axis=3)
    y = lax.conv_general_dilated(
        x_up, weight_oihw, window_strides=(1, 1), padding=((1, 1), (1, 1)),
        dimension_numbers=("NCHW", "OIHW", "NCHW"))
    scale = (gamma / jnp.sqrt(var + eps)).reshape(1, -1, 1, 1)
    shift = (beta - mean * gamma / jnp.sqrt(var + eps)).reshape(1, -1, 1, 1)
    return jnp.maximum(y * scale + shift, 0.0)


if __name__ == "__main__":
    in_ch, out_ch = 4, 8
    N, H, W = 2, 16, 16

    key = jax.random.PRNGKey(0)
    kx, kw, kg, kb, km, kv = jax.random.split(key, 6)

    x = jax.random.normal(kx, (N, in_ch, H, W), dtype=jnp.float32)
    # Conv2d(in_ch, out_ch, kernel_size=3, bias=False) weight: (out_ch, in_ch, 3, 3)
    weight = jax.random.normal(kw, (out_ch, in_ch, 3, 3), dtype=jnp.float32) * 0.1
    gamma = 1.0 + 0.1 * jax.random.normal(kg, (out_ch,), dtype=jnp.float32)
    beta = 0.1 * jax.random.normal(kb, (out_ch,), dtype=jnp.float32)
    running_mean = 0.1 * jax.random.normal(km, (out_ch,), dtype=jnp.float32)
    running_var = 1.0 + 0.1 * jax.random.uniform(kv, (out_ch,), dtype=jnp.float32)

    out = up_conv_forward(x, weight, gamma, beta, running_mean, running_var)
    out = jax.block_until_ready(out)

    ref = _reference(x, weight, gamma, beta, running_mean, running_var)
    assert out.shape == (N, out_ch, 2 * H, 2 * W), out.shape
    assert jnp.allclose(out, ref, atol=1e-4, rtol=1e-4), "mismatch vs reference"

    print("KERNEL_OK")
</pallas_src>

<mosaic_0001>
module attributes {stable_mosaic.version = 11 : i64} {
  func.func @_upconv_kernel(%arg0: i32, %arg1: i32, %arg2: memref<1x1x6x18x4xf32, #tpu.memory_space<vmem>>, %arg3: memref<36x32xf32, #tpu.memory_space<vmem>>, %arg4: memref<1x32xf32, #tpu.memory_space<vmem>>, %arg5: memref<1x4x2x16x16xf32, #tpu.memory_space<vmem>>) attributes {dimension_semantics = [#tpu.dimension_semantics<parallel>, #tpu.dimension_semantics<parallel>], iteration_bounds = array<i64: 2, 4>, scalar_prefetch = 0 : i64, scratch_operands = 0 : i64, tpu.core_type = #tpu.core_type<tc>, window_params = [{transform_indices = @transform_0, window_bounds = array<i64: 1, 1, 6, 18, 4>}, {pipeline_mode = #tpu.pipeline_mode<synchronous>, transform_indices = @transform_1, window_bounds = array<i64: 36, 32>}, {pipeline_mode = #tpu.pipeline_mode<synchronous>, transform_indices = @transform_2, window_bounds = array<i64: 1, 32>}, {transform_indices = @transform_3, window_bounds = array<i64: 1, 4, 2, 16, 16>}]} {
    %c0 = arith.constant 0 : index
    %c0_0 = arith.constant 0 : index
    %c0_1 = arith.constant 0 : index
    %c0_2 = arith.constant 0 : index
    %c0_3 = arith.constant 0 : index
    %0 = vector.load %arg2[%c0, %c0_0, %c0_1, %c0_2, %c0_3] : memref<1x1x6x18x4xf32, #tpu.memory_space<vmem>>, vector<1x1x6x18x4xf32>
    %1 = vector.shape_cast %0 : vector<1x1x6x18x4xf32> to vector<6x18x4xf32>
    %2 = vector.extract_strided_slice %1 {offsets = [0, 0, 0], sizes = [4, 16, 4], strides = [1, 1, 1]} : vector<6x18x4xf32> to vector<4x16x4xf32>
    %3 = vector.shape_cast %2 : vector<4x16x4xf32> to vector<64x4xf32>
    %4 = vector.extract_strided_slice %1 {offsets = [0, 1, 0], sizes = [4, 16, 4], strides = [1, 1, 1]} : vector<6x18x4xf32> to vector<4x16x4xf32>
    %5 = vector.shape_cast %4 : vector<4x16x4xf32> to vector<64x4xf32>
    %6 = vector.extract_strided_slice %1 {offsets = [0, 2, 0], sizes = [4, 16, 4], strides = [1, 1, 1]} : vector<6x18x4xf32> to vector<4x16x4xf32>
    %7 = vector.shape_cast %6 : vector<4x16x4xf32> to vector<64x4xf32>
    %8 = vector.extract_strided_slice %1 {offsets = [1, 0, 0], sizes = [4, 16, 4], strides = [1, 1, 1]} : vector<6x18x4xf32> to vector<4x16x4xf32>
    %9 = vector.shape_cast %8 : vector<4x16x4xf32> to vector<64x4xf32>
    %10 = vector.extract_strided_slice %1 {offsets = [1, 1, 0], sizes = [4, 16, 4], strides = [1, 1, 1]} : vector<6x18x4xf32> to vector<4x16x4xf32>
    %11 = vector.shape_cast %10 : vector<4x16x4xf32> to vector<64x4xf32>
    %12 = vector.extract_strided_slice %1 {offsets = [1, 2, 0], sizes = [4, 16, 4], strides = [1, 1, 1]} : vector<6x18x4xf32> to vector<4x16x4xf32>
    %13 = vector.shape_cast %12 : vector<4x16x4xf32> to vector<64x4xf32>
    %14 = vector.extract_strided_slice %1 {offsets = [2, 0, 0], sizes = [4, 16, 4], strides = [1, 1, 1]} : vector<6x18x4xf32> to vector<4x16x4xf32>
    %15 = vector.shape_cast %14 : vector<4x16x4xf32> to vector<64x4xf32>
    %16 = vector.extract_strided_slice %1 {offsets = [2, 1, 0], sizes = [4, 16, 4], strides = [1, 1, 1]} : vector<6x18x4xf32> to vector<4x16x4xf32>
    %17 = vector.shape_cast %16 : vector<4x16x4xf32> to vector<64x4xf32>
    %18 = vector.extract_strided_slice %1 {offsets = [2, 2, 0], sizes = [4, 16, 4], strides = [1, 1, 1]} : vector<6x18x4xf32> to vector<4x16x4xf32>
    %19 = vector.shape_cast %18 : vector<4x16x4xf32> to vector<64x4xf32>
    %20 = tpu.concatenate %3, %5, %7, %9, %11, %13, %15, %17, %19 in 1 : vector<64x4xf32>, vector<64x4xf32>, vector<64x4xf32>, vector<64x4xf32>, vector<64x4xf32>, vector<64x4xf32>, vector<64x4xf32>, vector<64x4xf32>, vector<64x4xf32> -> vector<64x36xf32>
    %c0_4 = arith.constant 0 : index
    %c0_5 = arith.constant 0 : index
    %21 = vector.load %arg3[%c0_4, %c0_5] : memref<36x32xf32, #tpu.memory_space<vmem>>, vector<36x32xf32>
    %cst = arith.constant dense<0.000000e+00> : vector<64x32xf32>
    %22 = tpu.matmul %20, %21, %cst {dimension_numbers = #tpu.dot_dimension_numbers<[1], [0], [0], [1], [0, 0, 1, 1], [], []>} : vector<64x36xf32>, vector<36x32xf32>, vector<64x32xf32> -> vector<64x32xf32>
    %c0_6 = arith.constant 0 : index
    %c0_7 = arith.constant 0 : index
    %23 = vector.load %arg4[%c0_6, %c0_7] : memref<1x32xf32, #tpu.memory_space<vmem>>, vector<1x32xf32>
    %24 = vector.broadcast %23 : vector<1x32xf32> to vector<64x32xf32>
    %25 = arith.addf %22, %24 : vector<64x32xf32>
    %cst_8 = arith.constant 0.000000e+00 : f32
    %26 = vector.broadcast %cst_8 : f32 to vector<64x32xf32>
    %27 = arith.maximumf %25, %26 : vector<64x32xf32>
    %28 = vector.shape_cast %27 : vector<64x32xf32> to vector<4x16x32xf32>
    %29 = vector.extract_strided_slice %28 {offsets = [0, 0, 0], sizes = [4, 16, 16], strides = [1, 1, 1]} : vector<4x16x32xf32> to vector<4x16x16xf32>
    %c0_9 = arith.constant 0 : index
    %c0_10 = arith.constant 0 : index
    %c0_11 = arith.constant 0 : index
    %c0_12 = arith.constant 0 : index
    %c0_13 = arith.constant 0 : index
    %30 = vector.load %arg5[%c0_9, %c0_10, %c0_11, %c0_12, %c0_13] : memref<1x4x2x16x16xf32, #tpu.memory_space<vmem>>, vector<1x4x1x16x16xf32>
    %31 = vector.shape_cast %30 : vector<1x4x1x16x16xf32> to vector<4x16x16xf32>
    %32 = vector.shape_cast %29 : vector<4x16x16xf32> to vector<1x4x1x16x16xf32>
    tpu.vector_store %arg5[%c0_9, %c0_10, %c0_11, %c0_12, %c0_13], %32 {strides = array<i32>} : memref<1x4x2x16x16xf32, #tpu.memory_space<vmem>>, vector<1x4x1x16x16xf32>,
    %33 = vector.extract_strided_slice %28 {offsets = [0, 0, 16], sizes = [4, 16, 16], strides = [1, 1, 1]} : vector<4x16x32xf32> to vector<4x16x16xf32>
    %c0_14 = arith.constant 0 : index
    %c0_15 = arith.constant 0 : index
    %c1 = arith.constant 1 : index
    %c0_16 = arith.constant 0 : index
    %c0_17 = arith.constant 0 : index
    %34 = vector.load %arg5[%c0_14, %c0_15, %c1, %c0_16, %c0_17] : memref<1x4x2x16x16xf32, #tpu.memory_space<vmem>>, vector<1x4x1x16x16xf32>
    %35 = vector.shape_cast %34 : vector<1x4x1x16x16xf32> to vector<4x16x16xf32>
    %36 = vector.shape_cast %33 : vector<4x16x16xf32> to vector<1x4x1x16x16xf32>
    tpu.vector_store %arg5[%c0_14, %c0_15, %c1, %c0_16, %c0_17], %36 {strides = array<i32>} : memref<1x4x2x16x16xf32, #tpu.memory_space<vmem>>, vector<1x4x1x16x16xf32>,
    return
  }
  func.func @transform_0(%arg0: i32, %arg1: i32) -> (i32, i32, i32, i32, i32) {
    %c0_i32 = arith.constant 0 : i32
    %c0_i32_0 = arith.constant 0 : i32
    %c0_i32_1 = arith.constant 0 : i32
    %c0_i32_2 = arith.constant 0 : i32
    return %arg0, %arg1, %c0_i32, %c0_i32_0, %c0_i32_1 : i32, i32, i32, i32, i32
  }
  func.func @transform_1(%arg0: i32, %arg1: i32) -> (i32, i32) {
    %c0_i32 = arith.constant 0 : i32
    %c0_i32_0 = arith.constant 0 : i32
    %c0_i32_1 = arith.constant 0 : i32
    return %c0_i32, %c0_i32_0 : i32, i32
  }
  func.func @transform_2(%arg0: i32, %arg1: i32) -> (i32, i32) {
    %c0_i32 = arith.constant 0 : i32
    %c0_i32_0 = arith.constant 0 : i32
    %c0_i32_1 = arith.constant 0 : i32
    return %c0_i32, %c0_i32_0 : i32, i32
  }
  func.func @transform_3(%arg0: i32, %arg1: i32) -> (i32, i32, i32, i32, i32) {
    %c0_i32 = arith.constant 0 : i32
    %c0_i32_0 = arith.constant 0 : i32
    %c0_i32_1 = arith.constant 0 : i32
    %c0_i32_2 = arith.constant 0 : i32
    return %arg0, %arg1, %c0_i32, %c0_i32_0, %c0_i32_1 : i32, i32, i32, i32, i32
  }
}

</mosaic_0001>

<llo_original>
// kernel: tpu_custom_call.1
$region0: #{tpu_custom_call.1}
  #allocation0 [shape = 'u32[]', space=smem, size = 0x4, offset = 0x4, fixed_abs, tag = 'smem constant byte address 0x4 - core index']
  #allocation1 [shape = 'u32[144,128]{1,0:T(1,128)}', space=vmem, size = 0x12000, scoped, tag = 'internal scratch']
  %s0 = inlined_call_operand.vmem [shape: f32[2,4,6,18,4], index: 0, kind: input, shape index: {}]
  %s1 = inlined_call_operand.vmem [shape: f32[36,32], index: 1, kind: input, shape index: {}]
  %s2 = inlined_call_operand.vmem [shape: f32[1,32], index: 2, kind: input, shape index: {}]
  %s3 = inlined_call_operand.hbm [shape: f32[2,16,2,16,16], index: 3, kind: output, shape index: {}]
  %s4 = sld [smem:[#allocation0]]
  $region45: #{tpu_custom_call.1} parent=0
    _
  %s6 = ssub.s32 1, %s4
  %s7 = scalar_select 0, %s6, %s4
  $region1: #{tpu_custom_call.1} parent=0
    #allocation2 [shape = 'u8[131072]{0}', space=vmem, size = 0x20000, scoped, tag = 'output window, operand 0']
    #allocation3 [shape = 's32[2]{0}', space=sflag, size = 0x8, scoped, tag = 'scoped memory for tpu_custom_call.1']
    %8 = vsyncpa [#allocation3], 0
    %s9 = scalar_lea.sflag [#allocation3], 1
    %10 = vsyncpa %s9, 0
    loop: start=0, step=1, limit=10
    $region2: #{tpu_custom_call.1} parent=1 // loop_pre_header
      _
    $region3: #{tpu_custom_call.1} parent=1 // loop_header
      %s12 = sphi 0, %s16
      %p13 = scmp.ge.s32.totalorder %s12, 10
      %s19 = sphi 0, %s31
      %s20 = sphi 0, %s27
      %s21 = sphi 0, %s19
      %s22 = sphi 0, %s20
      %s23 = sphi 0, %s21
      %s24 = sphi 0, %s22
      %s36 = sphi 0, %s38
      %s39 = sphi 0, %s36
      %s40 = sphi 0, %s39
      %s56 = sphi 0, %s40
      %s60 = sphi 0, %s60
      %s62 = sphi 0, %s60
      %s63 = sphi 0, %s62
      %s77 = sphi 0, %s63
      %s81 = sphi 0, %s81
      %s83 = sphi 0, %s81
      %s84 = sphi 0, %s83
      %s98 = sphi 0, %s84
      %s106 = sphi 0, %s108
      %s109 = sphi 0, %s106
      %s110 = sphi 0, %s109
      %s126 = sphi 0, %s110
    $region4: #{tpu_custom_call.1} parent=1 // loop_header_branch
      %15 = sbr.rel (%p13) target = $region8
    $region5: #{tpu_custom_call.1} parent=1 // loop_body
      %s17 = ssub.s32 %s12, 1
      %s18 = ssub.s32 %s12, 2
      %s25 = sadd.s32 1, %s20
      %p26 = scmp.ge.s32.totalorder %s25, 4
      %s27 = scalar_select %p26, 0, %s25
      %s28 = sadd.s32 1, %s19
      %s29 = scalar_select %p26, %s28, %s19
      %p30 = scmp.ge.s32.totalorder %s29, 2
      %s31 = scalar_select %p30, 0, %s29
      %s32 = ssub.s32 %s19, %s31
      %s33 = ssub.s32 %s20, %s27
      %s34 = sor.u32 %s32, %s33
      %p35 = scmp.eq.s32.totalorder %s34, 0
      %s37 = sadd.s32 %s36, 1
      %s38 = scalar_select %p35, %s36, %s37
      %p41 = pneg %p35
      %p42 = scmp.eq.s32.totalorder %s12, 7
      %p43 = por %p41, %p42
      %p44 = scmp.ne.s32.totalorder %s36, %s39
      %p45 = scmp.eq.s32.totalorder %s12, 0
      %p46 = por %p44, %p45
      %p47 = scmp.ne.s32.totalorder %s36, %s39
      %p48 = scmp.eq.s32.totalorder %s17, 7
      %p49 = por %p47, %p48
      %p50 = scmp.ne.s32.totalorder %s39, %s40
      %p51 = scmp.eq.s32.totalorder %s17, 0
      %p52 = por %p50, %p51
      %p53 = scmp.ne.s32.totalorder %s39, %s40
      %p54 = scmp.eq.s32.totalorder %s18, 7
      %p55 = por %p53, %p54
      %p57 = scmp.ne.s32.totalorder %s40, %s56
      %p58 = scmp.eq.s32.totalorder %s18, 0
      %p59 = por %p57, %p58
      %s61 = sadd.s32 %s60, 1
      %p64 = scmp.eq.s32.totalorder %s12, 7
      %p65 = scmp.ne.s32.totalorder %s60, %s62
      %p66 = scmp.eq.s32.totalorder %s12, 0
      %p67 = por %p65, %p66
      %p68 = scmp.ne.s32.totalorder %s60, %s62
      %p69 = scmp.eq.s32.totalorder %s17, 7
      %p70 = por %p68, %p69
      %p71 = scmp.ne.s32.totalorder %s62, %s63
      %p72 = scmp.eq.s32.totalorder %s17, 0
      %p73 = por %p71, %p72
      %p74 = scmp.ne.s32.totalorder %s62, %s63
      %p75 = scmp.eq.s32.totalorder %s18, 7
      %p76 = por %p74, %p75
      %p78 = scmp.ne.s32.totalorder %s63, %s77
      %p79 = scmp.eq.s32.totalorder %s18, 0
      %p80 = por %p78, %p79
      %s82 = sadd.s32 %s81, 1
      %p85 = scmp.eq.s32.totalorder %s12, 7
      %p86 = scmp.ne.s32.totalorder %s81, %s83
      %p87 = scmp.eq.s32.totalorder %s12, 0
      %p88 = por %p86, %p87
      %p89 = scmp.ne.s32.totalorder %s81, %s83
      %p90 = scmp.eq.s32.totalorder %s17, 7
      %p91 = por %p89, %p90
      %p92 = scmp.ne.s32.totalorder %s83, %s84
      %p93 = scmp.eq.s32.totalorder %s17, 0
      %p94 = por %p92, %p93
      %p95 = scmp.ne.s32.totalorder %s83, %s84
      %p96 = scmp.eq.s32.totalorder %s18, 7
      %p97 = por %p95, %p96
      %p99 = scmp.ne.s32.totalorder %s84, %s98
      %p100 = scmp.eq.s32.totalorder %s18, 0
      %p101 = por %p99, %p100
      %s102 = ssub.s32 %s19, %s31
      %s103 = ssub.s32 %s20, %s27
      %s104 = sor.u32 %s102, %s103
      %p105 = scmp.eq.s32.totalorder %s104, 0
      %s107 = sadd.s32 %s106, 1
      %s108 = scalar_select %p105, %s106, %s107
      %p111 = pneg %p105
      %p112 = scmp.eq.s32.totalorder %s12, 7
      %p113 = por %p111, %p112
      %p114 = scmp.ne.s32.totalorder %s106, %s109
      %p115 = scmp.eq.s32.totalorder %s12, 0
      %p116 = por %p114, %p115
      %p117 = scmp.ne.s32.totalorder %s106, %s109
      %p118 = scmp.eq.s32.totalorder %s17, 7
      %p119 = por %p117, %p118
      %p120 = scmp.ne.s32.totalorder %s109, %s110
      %p121 = scmp.eq.s32.totalorder %s17, 0
      %p122 = por %p120, %p121
      %p123 = scmp.ne.s32.totalorder %s109, %s110
      %p124 = scmp.eq.s32.totalorder %s18, 7
      %p125 = por %p123, %p124
      %p127 = scmp.ne.s32.totalorder %s110, %s126
      %p128 = scmp.eq.s32.totalorder %s18, 0
      %p129 = por %p127, %p128
      %p130 = scmp.le.s32.totalorder 1, %s12
      %p131 = scmp.lt.s32.totalorder %s12, 9
      %p132 = pnand %p130, %p131
      %p133 = pneg %p132
      // Predicated region
      $region9: #{tpu_custom_call.1} parent=5 // pred_check
        _
      $region10: #{tpu_custom_call.1} parent=5 // pred_check_branch
        %135 = sbr.rel (%p132) target = $region12
      $region11: #{tpu_custom_call.1} parent=5 // pred_region
        %s136 = ssub.s32 %s12, 1
        // Predicated region
        $region13: #{tpu_custom_call.1} parent=11 // pred_check
          %p137 = pneg %p73
        $region14: #{tpu_custom_call.1} parent=11 // pred_check_branch
          %139 = sbr.rel (%p137) target = $region16
        $region15: #{tpu_custom_call.1} parent=11 // pred_region
          _
        $region16: #{tpu_custom_call.1} parent=11 // pred_fallthru
          _
        // Predicated region
        $region17: #{tpu_custom_call.1} parent=11 // pred_check
          %p140 = pneg %p94
        $region18: #{tpu_custom_call.1} parent=11 // pred_check_branch
          %142 = sbr.rel (%p140) target = $region20
        $region19: #{tpu_custom_call.1} parent=11 // pred_region
          _
        $region20: #{tpu_custom_call.1} parent=11 // pred_fallthru
          _
      $region12: #{tpu_custom_call.1} parent=5 // pred_fallthru
        _
      %p143 = scmp.lt.s32.totalorder %s12, 8
      // Predicated region
      $region21: #{tpu_custom_call.1} parent=5 // pred_check
        %p144 = pneg %p143
      $region22: #{tpu_custom_call.1} parent=5 // pred_check_branch
        %146 = sbr.rel (%p144) target = $region24
      $region23: #{tpu_custom_call.1} parent=5 // pred_region
        // Predicated region
        $region25: #{tpu_custom_call.1} parent=23 // pred_check
          %p147 = pneg %p46
        $region26: #{tpu_custom_call.1} parent=23 // pred_check_branch
          %149 = sbr.rel (%p147) target = $region28
        $region27: #{tpu_custom_call.1} parent=23 // pred_region
          %p150 = scmp.lt.s32.totalorder %s19, 1
          %s151 = scalar_select %p150, %s19, 1
          %p152 = scmp.lt.s32.totalorder %s20, 3
          %s153 = scalar_select %p152, %s20, 3
          %s154 = smul.addr %s153, 18
          %s155 = smul.addr %s151, 72
          %s156 = sadd.s32 %s154, %s155
          %s157 = smul.addr %s156, 8
          %s158 = scalar_lea.vmem %s0, %s157
        $region28: #{tpu_custom_call.1} parent=23 // pred_fallthru
          _
      $region24: #{tpu_custom_call.1} parent=5 // pred_fallthru
        _
      %p159 = scmp.le.s32.totalorder 1, %s12
      %p160 = scmp.lt.s32.totalorder %s12, 9
      %p161 = pnand %p159, %p160
      %p162 = pneg %p161
      // Predicated region
      $region29: #{tpu_custom_call.1} parent=5 // pred_check
        _
      $region30: #{tpu_custom_call.1} parent=5 // pred_check_branch
        %164 = sbr.rel (%p161) target = $region32
      $region31: #{tpu_custom_call.1} parent=5 // pred_region
        %s165 = ssub.s32 %s12, 1
        %p166 = scmp.lt.s32.totalorder %s21, 1
        %s167 = scalar_select %p166, %s21, 1
        %p168 = scmp.lt.s32.totalorder %s22, 3
        %s169 = scalar_select %p168, %s22, 3
        %s170 = smul.addr %s169, 18
        %s171 = smul.addr %s167, 72
        %s172 = sadd.s32 %s170, %s171
        %s173 = smul.addr %s172, 8
        %s174 = scalar_lea.vmem %s0, %s173
        %p175 = pneg %p52
        %p176 = pneg %p49
        %p177 = pneg %p73
        %p178 = pneg %p70
        %p179 = pneg %p94
        %p180 = pneg %p91
        %p181 = pneg %p122
        %p182 = pneg %p119
        %s183 = sand.u32 %s109, 1
        %s184 = scalar_lea.sflag [#allocation3], %s183
        %s185 = sand.u32 %s109, 1
        %s186 = smul.addr %s185, 128
        %s187 = scalar_lea.vmem [#allocation2], %s186
        %p188 = scmp.lt.s32.totalorder %s21, 1
        %s189 = scalar_select %p188, %s21, 1
        %p190 = scmp.lt.s32.totalorder %s22, 3
        %s191 = scalar_select %p190, %s22, 3
        %s192 = smul.addr %s191, 18
        %s193 = smul.addr %s189, 72
        %s194 = sadd.s32 %s192, %s193
        %s195 = smul.addr %s194, 8
        %s196 = scalar_lea.vmem %s0, %s195
        %s197 = smul.u32 4, %s22
        %v198 = vld [vmem:[%s196] sm:$0xff]
        %v199 = vld [vmem:[%s196 + $0x8] sm:$0xff]
        %v200 = vld [vmem:[%s196 + $0x10] sm:$0x3]
        %v201 = vld [vmem:[%s196 + $0x18] sm:$0xff]
        %v202 = vld [vmem:[%s196 + $0x20] sm:$0xff]
        %v203 = vld [vmem:[%s196 + $0x28] sm:$0x3]
        %v204 = vld [vmem:[%s196 + $0x30] sm:$0xff]
        %v205 = vld [vmem:[%s196 + $0x38] sm:$0xff]
        %v206 = vld [vmem:[%s196 + $0x40] sm:$0x3]
        %v207 = vld [vmem:[%s196 + $0x48] sm:$0xff]
        %v208 = vld [vmem:[%s196 + $0x50] sm:$0xff]
        %v209 = vld [vmem:[%s196 + $0x58] sm:$0x3]
        %v210 = vld [vmem:[%s196 + $0x60] sm:$0xff]
        %v211 = vld [vmem:[%s196 + $0x68] sm:$0xff]
        %v212 = vld [vmem:[%s196 + $0x70] sm:$0x3]
        %v213 = vld [vmem:[%s196 + $0x78] sm:$0xff]
        %v214 = vld [vmem:[%s196 + $0x80] sm:$0xff]
        %v215 = vld [vmem:[%s196 + $0x88] sm:$0x3]
        %vm228 = vcmask 1046528
        %v229 = vrot.slane %v198, 1
        %v230 = vrot.slane %v199, 1
        %v231 = vsel %vm228, %v229, %v230
        %v232 = vrot.slane %v200, 1
        %v233 = vsel %vm228, %v230, %v232
        %v234 = vrot.slane %v201, 1
        %v235 = vrot.slane %v202, 1
        %v236 = vsel %vm228, %v234, %v235
        %v237 = vrot.slane %v203, 1
        %v238 = vsel %vm228, %v235, %v237
        %v239 = vrot.slane %v204, 1
        %v240 = vrot.slane %v205, 1
        %v241 = vsel %vm228, %v239, %v240
        %v242 = vrot.slane %v206, 1
        %v243 = vsel %vm228, %v240, %v242
        %v244 = vrot.slane %v207, 1
        %v245 = vrot.slane %v208, 1
        %v246 = vsel %vm228, %v244, %v245
        %v247 = vrot.slane %v209, 1
        %v248 = vsel %vm228, %v245, %v247
        %vm249 = vcmask 1045504
        %v250 = vrot.slane %v198, 2
        %v251 = vrot.slane %v199, 2
        %v252 = vsel %vm249, %v250, %v251
        %v253 = vrot.slane %v200, 2
        %v254 = vsel %vm249, %v251, %v253
        %v255 = vrot.slane %v201, 2
        %v256 = vrot.slane %v202, 2
        %v257 = vsel %vm249, %v255, %v256
        %v258 = vrot.slane %v203, 2
        %v259 = vsel %vm249, %v256, %v258
        %v260 = vrot.slane %v204, 2
        %v261 = vrot.slane %v205, 2
        %v262 = vsel %vm249, %v260, %v261
        %v263 = vrot.slane %v206, 2
        %v264 = vsel %vm249, %v261, %v263
        %v265 = vrot.slane %v207, 2
        %v266 = vrot.slane %v208, 2
        %v267 = vsel %vm249, %v265, %v266
        %v268 = vrot.slane %v209, 2
        %v269 = vsel %vm249, %v266, %v268
        %v273 = vrot.slane %v210, 1
        %v274 = vrot.slane %v211, 1
        %v275 = vsel %vm228, %v273, %v274
        %v276 = vrot.slane %v212, 1
        %v277 = vsel %vm228, %v274, %v276
        %v278 = vrot.slane %v210, 2
        %v279 = vrot.slane %v211, 2
        %v280 = vsel %vm249, %v278, %v279
        %v281 = vrot.slane %v212, 2
        %v282 = vsel %vm249, %v279, %v281
        %v286 = vrot.slane %v213, 1
        %v287 = vrot.slane %v214, 1
        %v288 = vsel %vm228, %v286, %v287
        %v289 = vrot.slane %v215, 1
        %v290 = vsel %vm228, %v287, %v289
        %v291 = vrot.slane %v213, 2
        %v292 = vrot.slane %v214, 2
        %v293 = vsel %vm249, %v291, %v292
        %v294 = vrot.slane %v215, 2
        %v295 = vsel %vm249, %v292, %v294
        %296 = vrot.lane.b32.xlu0 %v231, 4
        %v297 = vpop.permute.xlu0 %296
        %298 = vrot.lane.b32.xlu0 %v233, 4
        %v299 = vpop.permute.xlu0 %298
        %300 = vrot.lane.b32.xlu0 %v236, 4
        %v301 = vpop.permute.xlu0 %300
        %302 = vrot.lane.b32.xlu0 %v238, 4
        %v303 = vpop.permute.xlu0 %302
        %304 = vrot.lane.b32.xlu0 %v241, 4
        %v305 = vpop.permute.xlu0 %304
        %306 = vrot.lane.b32.xlu0 %v243, 4
        %v307 = vpop.permute.xlu0 %306
        %308 = vrot.lane.b32.xlu0 %v246, 4
        %v309 = vpop.permute.xlu0 %308
        %310 = vrot.lane.b32.xlu0 %v248, 4
        %v311 = vpop.permute.xlu0 %310
        %320 = vrot.lane.b32.xlu0 %v252, 8
        %v321 = vpop.permute.xlu0 %320
        %322 = vrot.lane.b32.xlu0 %v254, 8
        %v323 = vpop.permute.xlu0 %322
        %324 = vrot.lane.b32.xlu0 %v257, 8
        %v325 = vpop.permute.xlu0 %324
        %326 = vrot.lane.b32.xlu0 %v259, 8
        %v327 = vpop.permute.xlu0 %326
        %328 = vrot.lane.b32.xlu0 %v262, 8
        %v329 = vpop.permute.xlu0 %328
        %330 = vrot.lane.b32.xlu0 %v264, 8
        %v331 = vpop.permute.xlu0 %330
        %332 = vrot.lane.b32.xlu0 %v267, 8
        %v333 = vpop.permute.xlu0 %332
        %334 = vrot.lane.b32.xlu0 %v269, 8
        %v335 = vpop.permute.xlu0 %334
        %344 = vrot.lane.b32.xlu0 %v201, 12
        %v345 = vpop.permute.xlu0 %344
        %346 = vrot.lane.b32.xlu0 %v202, 12
        %v347 = vpop.permute.xlu0 %346
        %348 = vrot.lane.b32.xlu0 %v204, 12
        %v349 = vpop.permute.xlu0 %348
        %350 = vrot.lane.b32.xlu0 %v205, 12
        %v351 = vpop.permute.xlu0 %350
        %352 = vrot.lane.b32.xlu0 %v207, 12
        %v353 = vpop.permute.xlu0 %352
        %354 = vrot.lane.b32.xlu0 %v208, 12
        %v355 = vpop.permute.xlu0 %354
        %356 = vrot.lane.b32.xlu0 %v210, 12
        %v357 = vpop.permute.xlu0 %356
        %358 = vrot.lane.b32.xlu0 %v211, 12
        %v359 = vpop.permute.xlu0 %358
        %368 = vrot.lane.b32.xlu0 %v236, 16
        %v369 = vpop.permute.xlu0 %368
        %370 = vrot.lane.b32.xlu0 %v238, 16
        %v371 = vpop.permute.xlu0 %370
        %372 = vrot.lane.b32.xlu0 %v241, 16
        %v373 = vpop.permute.xlu0 %372
        %374 = vrot.lane.b32.xlu0 %v243, 16
        %v375 = vpop.permute.xlu0 %374
        %376 = vrot.lane.b32.xlu0 %v246, 16
        %v377 = vpop.permute.xlu0 %376
        %378 = vrot.lane.b32.xlu0 %v248, 16
        %v379 = vpop.permute.xlu0 %378
        %380 = vrot.lane.b32.xlu0 %v275, 16
        %v381 = vpop.permute.xlu0 %380
        %382 = vrot.lane.b32.xlu0 %v277, 16
        %v383 = vpop.permute.xlu0 %382
        %392 = vrot.lane.b32.xlu0 %v257, 20
        %v393 = vpop.permute.xlu0 %392
        %394 = vrot.lane.b32.xlu0 %v259, 20
        %v395 = vpop.permute.xlu0 %394
        %396 = vrot.lane.b32.xlu0 %v262, 20
        %v397 = vpop.permute.xlu0 %396
        %398 = vrot.lane.b32.xlu0 %v264, 20
        %v399 = vpop.permute.xlu0 %398
        %400 = vrot.lane.b32.xlu0 %v267, 20
        %v401 = vpop.permute.xlu0 %400
        %402 = vrot.lane.b32.xlu0 %v269, 20
        %v403 = vpop.permute.xlu0 %402
        %404 = vrot.lane.b32.xlu0 %v280, 20
        %v405 = vpop.permute.xlu0 %404
        %406 = vrot.lane.b32.xlu0 %v282, 20
        %v407 = vpop.permute.xlu0 %406
        %416 = vrot.lane.b32.xlu0 %v204, 24
        %v417 = vpop.permute.xlu0 %416
        %418 = vrot.lane.b32.xlu0 %v205, 24
        %v419 = vpop.permute.xlu0 %418
        %420 = vrot.lane.b32.xlu0 %v207, 24
        %v421 = vpop.permute.xlu0 %420
        %422 = vrot.lane.b32.xlu0 %v208, 24
        %v423 = vpop.permute.xlu0 %422
        %424 = vrot.lane.b32.xlu0 %v210, 24
        %v425 = vpop.permute.xlu0 %424
        %426 = vrot.lane.b32.xlu0 %v211, 24
        %v427 = vpop.permute.xlu0 %426
        %428 = vrot.lane.b32.xlu0 %v213, 24
        %v429 = vpop.permute.xlu0 %428
        %430 = vrot.lane.b32.xlu0 %v214, 24
        %v431 = vpop.permute.xlu0 %430
        %440 = vrot.lane.b32.xlu0 %v241, 28
        %v441 = vpop.permute.xlu0 %440
        %442 = vrot.lane.b32.xlu0 %v243, 28
        %v443 = vpop.permute.xlu0 %442
        %444 = vrot.lane.b32.xlu0 %v246, 28
        %v445 = vpop.permute.xlu0 %444
        %446 = vrot.lane.b32.xlu0 %v248, 28
        %v447 = vpop.permute.xlu0 %446
        %448 = vrot.lane.b32.xlu0 %v275, 28
        %v449 = vpop.permute.xlu0 %448
        %450 = vrot.lane.b32.xlu0 %v277, 28
        %v451 = vpop.permute.xlu0 %450
        %452 = vrot.lane.b32.xlu0 %v288, 28
        %v453 = vpop.permute.xlu0 %452
        %454 = vrot.lane.b32.xlu0 %v290, 28
        %v455 = vpop.permute.xlu0 %454
        %464 = vrot.lane.b32.xlu0 %v262, 32
        %v465 = vpop.permute.xlu0 %464
        %466 = vrot.lane.b32.xlu0 %v264, 32
        %v467 = vpop.permute.xlu0 %466
        %468 = vrot.lane.b32.xlu0 %v267, 32
        %v469 = vpop.permute.xlu0 %468
        %470 = vrot.lane.b32.xlu0 %v269, 32
        %v471 = vpop.permute.xlu0 %470
        %472 = vrot.lane.b32.xlu0 %v280, 32
        %v473 = vpop.permute.xlu0 %472
        %474 = vrot.lane.b32.xlu0 %v282, 32
        %v475 = vpop.permute.xlu0 %474
        %476 = vrot.lane.b32.xlu0 %v293, 32
        %v477 = vpop.permute.xlu0 %476
        %478 = vrot.lane.b32.xlu0 %v295, 32
        %v479 = vpop.permute.xlu0 %478
        %vm488 = vcmask 31744
        %v489 = vsel %vm488, %v198, %v297
        %v490 = vsel %vm488, %v199, %v299
        %v491 = vsel %vm488, %v201, %v301
        %v492 = vsel %vm488, %v202, %v303
        %v493 = vsel %vm488, %v204, %v305
        %v494 = vsel %vm488, %v205, %v307
        %v495 = vsel %vm488, %v207, %v309
        %v496 = vsel %vm488, %v208, %v311
        %vm497 = vcmask 64512
        %v498 = vsel %vm497, %v489, %v321
        %v499 = vsel %vm497, %v490, %v323
        %v500 = vsel %vm497, %v491, %v325
        %v501 = vsel %vm497, %v492, %v327
        %v502 = vsel %vm497, %v493, %v329
        %v503 = vsel %vm497, %v494, %v331
        %v504 = vsel %vm497, %v495, %v333
        %v505 = vsel %vm497, %v496, %v335
        %vm506 = vcmask 97280
        %v507 = vsel %vm506, %v498, %v345
        %v508 = vsel %vm506, %v499, %v347
        %v509 = vsel %vm506, %v500, %v349
        %v510 = vsel %vm506, %v501, %v351
        %v511 = vsel %vm506, %v502, %v353
        %v512 = vsel %vm506, %v503, %v355
        %v513 = vsel %vm506, %v504, %v357
        %v514 = vsel %vm506, %v505, %v359
        %vm515 = vcmask 130048
        %v516 = vsel %vm515, %v507, %v369
        %v517 = vsel %vm515, %v508, %v371
        %v518 = vsel %vm515, %v509, %v373
        %v519 = vsel %vm515, %v510, %v375
        %v520 = vsel %vm515, %v511, %v377
        %v521 = vsel %vm515, %v512, %v379
        %v522 = vsel %vm515, %v513, %v381
        %v523 = vsel %vm515, %v514, %v383
        %vm524 = vcmask 162816
        %v525 = vsel %vm524, %v516, %v393
        %v526 = vsel %vm524, %v517, %v395
        %v527 = vsel %vm524, %v518, %v397
        %v528 = vsel %vm524, %v519, %v399
        %v529 = vsel %vm524, %v520, %v401
        %v530 = vsel %vm524, %v521, %v403
        %v531 = vsel %vm524, %v522, %v405
        %v532 = vsel %vm524, %v523, %v407
        %vm533 = vcmask 195584
        %v534 = vsel %vm533, %v525, %v417
        %v535 = vsel %vm533, %v526, %v419
        %v536 = vsel %vm533, %v527, %v421
        %v537 = vsel %vm533, %v528, %v423
        %v538 = vsel %vm533, %v529, %v425
        %v539 = vsel %vm533, %v530, %v427
        %v540 = vsel %vm533, %v531, %v429
        %v541 = vsel %vm533, %v532, %v431
        %vm542 = vcmask 228352
        %v543 = vsel %vm542, %v534, %v441
        %v544 = vsel %vm542, %v535, %v443
        %v545 = vsel %vm542, %v536, %v445
        %v546 = vsel %vm542, %v537, %v447
        %v547 = vsel %vm542, %v538, %v449
        %v548 = vsel %vm542, %v539, %v451
        %v549 = vsel %vm542, %v540, %v453
        %v550 = vsel %vm542, %v541, %v455
        %vm551 = vcmask 261120
        %v552 = vsel %vm551, %v543, %v465
        %v553 = vsel %vm551, %v544, %v467
        %v554 = vsel %vm551, %v545, %v469
        %v555 = vsel %vm551, %v546, %v471
        %v556 = vsel %vm551, %v547, %v473
        %v557 = vsel %vm551, %v548, %v475
        %v558 = vsel %vm551, %v549, %v477
        %v559 = vsel %vm551, %v550, %v479
        %v560 = vld [vmem:[%s1] sm:$0xff]
        %v561 = vld [vmem:[%s1 + $0x8] sm:$0xff]
        %v562 = vld [vmem:[%s1 + $0x10] sm:$0xff]
        %v563 = vld [vmem:[%s1 + $0x18] sm:$0xff]
        %v564 = vld [vmem:[%s1 + $0x20] sm:$0xf]
        %v565 = vld [vmem:[%s2] sm:$0x1]
        %v567 = vlaneseq
        %v568 = vshrl.u32 %v567, 7
        %v569 = vsub.s32 0, %v568
        %v570 = vrot.slane %v565, %v569
        %vm572 = vcmask 293888
        %v574 = vsel %vm572, %v552, 0
        %v577 = vsel %vm572, %v553, 0
        %v580 = vsel %vm572, %v554, 0
        %v583 = vsel %vm572, %v555, 0
        %v586 = vsel %vm572, %v556, 0
        %v589 = vsel %vm572, %v557, 0
        %v592 = vsel %vm572, %v558, 0
        %v595 = vsel %vm572, %v559, 0
        %vm597 = vcmask 1043456
        %v599 = vsel %vm597, %v564, 0
        %601 = vmatprep.subr.mxu0 0.0
        %602 = vmatpush1.msra.mxu0 0.0
        %603 = vmatprep.subr.mxu0 0.0
        %604 = vmatpush1.msra.mxu0 0.0
        %605 = vmatprep.subr.mxu0 0.0
        %606 = vmatpush1.msra.mxu0 0.0
        %607 = vmatprep.subr.mxu0 0.0
        %608 = vmatpush1.msra.mxu0 0.0
        %609 = vmatprep.subr.mxu0 0.0
        %610 = vmatpush1.msra.mxu0 0.0
        %611 = vmatprep.subr.mxu0 0.0
        %612 = vmatpush1.msra.mxu0 0.0
        %613 = vmatprep.subr.mxu0 0.0
        %614 = vmatpush1.msra.mxu0 0.0
        %615 = vmatprep.subr.mxu0 0.0
        %616 = vmatpush1.msra.mxu0 0.0
        %617 = vmatprep.subr.mxu0 0.0
        %618 = vmatpush1.msra.mxu0 0.0
        %619 = vmatprep.subr.mxu0 0.0
        %620 = vmatpush1.msra.mxu0 0.0
        %621 = vmatprep.subr.mxu0 0.0
        %622 = vmatpush1.msra.mxu0 0.0
        %623 = vmatprep.subr.mxu0 0.0
        %624 = vmatpush1.msra.mxu0 %v599
        %625 = vmatprep.subr.mxu0 0.0
        %626 = vmatpush1.msra.mxu0 %v563
        %627 = vmatprep.subr.mxu0 0.0
        %628 = vmatpush1.msra.mxu0 %v562
        %629 = vmatprep.subr.mxu0 0.0
        %630 = vmatpush1.msra.mxu0 %v561
        %631 = vmatprep.subr.mxu0 0.0
        %632 = vmatpush1.msra.mxu0 %v560
        %633 = vmatprep.subr.mxu0 0.0
        %634 = vmatpush2.msra.mxu0 0.0
        %635 = vmatprep.subr.mxu0 0.0
        %636 = vmatpush2.msra.mxu0 0.0
        %637 = vmatprep.subr.mxu0 0.0
        %638 = vmatpush2.msra.mxu0 0.0
        %639 = vmatprep.subr.mxu0 0.0
        %640 = vmatpush2.msra.mxu0 0.0
        %641 = vmatprep.subr.mxu0 0.0
        %642 = vmatpush2.msra.mxu0 0.0
        %643 = vmatprep.subr.mxu0 0.0
        %644 = vmatpush2.msra.mxu0 0.0
        %645 = vmatprep.subr.mxu0 0.0
        %646 = vmatpush2.msra.mxu0 0.0
        %647 = vmatprep.subr.mxu0 0.0
        %648 = vmatpush2.msra.mxu0 0.0
        %649 = vmatprep.subr.mxu0 0.0
        %650 = vmatpush2.msra.mxu0 0.0
        %651 = vmatprep.subr.mxu0 0.0
        %652 = vmatpush2.msra.mxu0 0.0
        %653 = vmatprep.subr.mxu0 0.0
        %654 = vmatpush2.msra.mxu0 0.0
        %655 = vmatprep.subr.mxu0 0.0
        %656 = vmatpush2.msra.mxu0 0.0
        %657 = vmatprep.subr.mxu0 0.0
        %658 = vmatpush2.msra.mxu0 0.0
        %659 = vmatprep.subr.mxu0 0.0
        %660 = vmatpush2.msra.mxu0 0.0
        %661 = vmatprep.subr.mxu0 0.0
        %662 = vmatpush2.msra.mxu0 0.0
        %663 = vmatprep.subr.mxu0 0.0
        %664 = vmatpush2.msra.mxu0 0.0
        %665 = vmatprep.mubr.f32.mxu0 0.0
        %666 = vmatmul.mubr.f32.gmra.mxu0 %v574
        %v667 = vpop.f32.mrf.mxu0
        %v668 = vadd.f32 %v570, %v667
        %v669 = vpop.f32.mrf.mxu0
        %670 = vmatprep.mubr.f32.mxu0 0.0
        %671 = vmatmul.mubr.f32.gmra.mxu0 %v577
        %v672 = vpop.f32.mrf.mxu0
        %v673 = vadd.f32 %v570, %v672
        %v674 = vpop.f32.mrf.mxu0
        %675 = vmatprep.mubr.f32.mxu0 0.0
        %676 = vmatmul.mubr.f32.gmra.mxu0 %v580
        %v677 = vpop.f32.mrf.mxu0
        %v678 = vadd.f32 %v570, %v677
        %v679 = vpop.f32.mrf.mxu0
        %680 = vmatprep.mubr.f32.mxu0 0.0
        %681 = vmatmul.mubr.f32.gmra.mxu0 %v583
        %v682 = vpop.f32.mrf.mxu0
        %v683 = vadd.f32 %v570, %v682
        %v684 = vpop.f32.mrf.mxu0
        %685 = vmatprep.mubr.f32.mxu0 0.0
        %686 = vmatmul.mubr.f32.gmra.mxu0 %v586
        %v687 = vpop.f32.mrf.mxu0
        %v688 = vadd.f32 %v570, %v687
        %v689 = vpop.f32.mrf.mxu0
        %690 = vmatprep.mubr.f32.mxu0 0.0
        %691 = vmatmul.mubr.f32.gmra.mxu0 %v589
        %v692 = vpop.f32.mrf.mxu0
        %v693 = vadd.f32 %v570, %v692
        %v694 = vpop.f32.mrf.mxu0
        %695 = vmatprep.mubr.f32.mxu0 0.0
        %696 = vmatmul.mubr.f32.gmra.mxu0 %v592
        %v697 = vpop.f32.mrf.mxu0
        %v698 = vadd.f32 %v570, %v697
        %v699 = vpop.f32.mrf.mxu0
        %700 = vmatprep.mubr.f32.mxu0 0.0
        %701 = vmatmul.mubr.f32.gmra.mxu0 %v595
        %v702 = vpop.f32.mrf.mxu0
        %v703 = vadd.f32 %v570, %v702
        %v704 = vpop.f32.mrf.mxu0
        %705 = vdwg.mxu0
        %v706 = vmax.f32 %v668, 0.0
        %v707 = vmax.f32 %v673, 0.0
        %v708 = vmax.f32 %v678, 0.0
        %v709 = vmax.f32 %v683, 0.0
        %v710 = vmax.f32 %v688, 0.0
        %v711 = vmax.f32 %v693, 0.0
        %v712 = vmax.f32 %v698, 0.0
        %v713 = vmax.f32 %v703, 0.0
        %714 = vst.msk [vmem:[%s187] sm:$0xff] %vm515, %v706
        %715 = vst.msk [vmem:[%s187 + $0x8] sm:$0xff] %vm515, %v707
        %716 = vst.msk [vmem:[%s187 + $0x20] sm:$0xff] %vm515, %v708
        %717 = vst.msk [vmem:[%s187 + $0x28] sm:$0xff] %vm515, %v709
        %718 = vst.msk [vmem:[%s187 + $0x40] sm:$0xff] %vm515, %v710
        %719 = vst.msk [vmem:[%s187 + $0x48] sm:$0xff] %vm515, %v711
        %720 = vst.msk [vmem:[%s187 + $0x60] sm:$0xff] %vm515, %v712
        %721 = vst.msk [vmem:[%s187 + $0x68] sm:$0xff] %vm515, %v713
        %730 = vrot.lane.b32.xlu0 %v706, 112
        %v731 = vpop.permute.xlu0 %730
        %732 = vrot.lane.b32.xlu0 %v707, 112
        %v733 = vpop.permute.xlu0 %732
        %734 = vrot.lane.b32.xlu0 %v708, 112
        %v735 = vpop.permute.xlu0 %734
        %736 = vrot.lane.b32.xlu0 %v709, 112
        %v737 = vpop.permute.xlu0 %736
        %738 = vrot.lane.b32.xlu0 %v710, 112
        %v739 = vpop.permute.xlu0 %738
        %740 = vrot.lane.b32.xlu0 %v711, 112
        %v741 = vpop.permute.xlu0 %740
        %742 = vrot.lane.b32.xlu0 %v712, 112
        %v743 = vpop.permute.xlu0 %742
        %744 = vrot.lane.b32.xlu0 %v713, 112
        %v745 = vpop.permute.xlu0 %744
        %s754 = scalar_lea.vmem %s187, 16 [#allocation2]
        %755 = vst.msk [vmem:[%s754] sm:$0xff] %vm515, %v731
        %756 = vst.msk [vmem:[%s754 + $0x8] sm:$0xff] %vm515, %v733
        %757 = vst.msk [vmem:[%s754 + $0x20] sm:$0xff] %vm515, %v735
        %758 = vst.msk [vmem:[%s754 + $0x28] sm:$0xff] %vm515, %v737
        %759 = vst.msk [vmem:[%s754 + $0x40] sm:$0xff] %vm515, %v739
        %760 = vst.msk [vmem:[%s754 + $0x48] sm:$0xff] %vm515, %v741
        %761 = vst.msk [vmem:[%s754 + $0x60] sm:$0xff] %vm515, %v743
        %762 = vst.msk [vmem:[%s754 + $0x68] sm:$0xff] %vm515, %v745
        %s763 = sand.u32 %s109, 1
        %s764 = scalar_lea.sflag [#allocation3], %s763
        %s765 = sand.u32 %s109, 1
        %s766 = smul.addr %s765, 128
        %s767 = scalar_lea.vmem [#allocation2], %s766
        // Predicated region
        $region33: #{tpu_custom_call.1} parent=31 // pred_check
          %p768 = pneg %p119
        $region34: #{tpu_custom_call.1} parent=31 // pred_check_branch
          %770 = sbr.rel (%p768) target = $region36
        $region35: #{tpu_custom_call.1} parent=31 // pred_region
          %s771 = smul.u32 4, %s22
          %s773 = ssub.s32 2048, 2048
          %774 = vsyncadd %s764, %s773
          %s775 = smul.addr %s771, 4
          %s776 = smul.addr %s21, 64
          %s777 = sadd.s32 %s775, %s776
          %s778 = smul.addr %s777, 128
          %s779 = scalar_lea.hbm %s3, %s778
          %s780 = sshll.u32 %s767, 4
          %s781 = int_to_ptr.vmem [resolvable:$true] %s780
          %786 = dma.vmem_to_hbm [thread:$0]  %s781, 2048, %s779, %s764, 128, 128, 8
        $region36: #{tpu_custom_call.1} parent=31 // pred_fallthru
          _
      $region32: #{tpu_custom_call.1} parent=5 // pred_fallthru
        _
      %p787 = scmp.le.s32.totalorder 2, %s12
      // Predicated region
      $region37: #{tpu_custom_call.1} parent=5 // pred_check
        %p788 = pneg %p787
      $region38: #{tpu_custom_call.1} parent=5 // pred_check_branch
        %790 = sbr.rel (%p788) target = $region40
      $region39: #{tpu_custom_call.1} parent=5 // pred_region
        %s791 = ssub.s32 %s12, 2
        // Predicated region
        $region41: #{tpu_custom_call.1} parent=39 // pred_check
          %p792 = pneg %p125
        $region42: #{tpu_custom_call.1} parent=39 // pred_check_branch
          %794 = sbr.rel (%p792) target = $region44
        $region43: #{tpu_custom_call.1} parent=39 // pred_region
          %s795 = sand.u32 %s110, 1
          %s796 = scalar_lea.sflag [#allocation3], %s795
          %s797 = sand.u32 %s110, 1
          %s798 = smul.addr %s797, 128
          %s799 = scalar_lea.vmem [#allocation2], %s798
          %800 = dma.done %s796, 2048
        $region44: #{tpu_custom_call.1} parent=39 // pred_fallthru
          _
      $region40: #{tpu_custom_call.1} parent=5 // pred_fallthru
        _
    $region6: #{tpu_custom_call.1} parent=1 // loop_footer
      %s16 = sadd.s32 1, %s12
    $region7: #{tpu_custom_call.1} parent=1 // loop_footer_branch
      %11 = sbr.rel target = $region3
    $region8: #{tpu_custom_call.1} parent=1 // loop_exit
      _
    %801 = vsyncpa [#allocation3], 1
    %s802 = scalar_lea.sflag [#allocation3], 1
    %803 = vsyncpa %s802, 1

</llo_original>
